<compile_context>
chip_gen: v5e
topology: v5e:2x2
jax: 0.10.0
libtpu: 0.0.40
codegen_flags: <defaults>
</compile_context>

<pallas_src>
import functools

import jax
import jax.numpy as jnp
from jax.experimental import pallas as pl
from jax.experimental.pallas import tpu as pltpu

_LANE = 128
_NEG_BIG = -1e30  # mask value for padded log_softmax columns
_VMEM_LIMIT = 48 * 1024 * 1024  # above scoped defaults; < 64 MiB v7x physical


def _round_up(x, m):
    return ((x + m - 1) // m) * m


# ---------------------------------------------------------------------------
# Kernel 1: feature transform  XW = X @ W   (cheap: N*Fin*Fout flops)
# ---------------------------------------------------------------------------
def _feat_transform_kernel(x_ref, w_ref, o_ref):
    xw = jnp.dot(
        x_ref[...].astype(jnp.bfloat16),
        w_ref[...].astype(jnp.bfloat16),
        preferred_element_type=jnp.float32,
    )
    o_ref[...] = xw.astype(o_ref.dtype)


def feat_transform(x, w, *, tm=256):
    """XW = X @ W, tiled over rows.  Output in bf16 for the MXU-heavy agg kernel."""
    n_pad, f_in = x.shape
    f_out = w.shape[1]
    return pl.pallas_call(
        _feat_transform_kernel,
        out_shape=jax.ShapeDtypeStruct((n_pad, f_out), jnp.bfloat16),
        grid=(n_pad // tm,),
        in_specs=[
            pl.BlockSpec((tm, f_in), lambda i: (i, 0)),
            pl.BlockSpec((f_in, f_out), lambda i: (0, 0)),
        ],
        out_specs=pl.BlockSpec((tm, f_out), lambda i: (i, 0)),
        compiler_params=pltpu.CompilerParams(
            dimension_semantics=("parallel",),
            vmem_limit_bytes=_VMEM_LIMIT,
        ),
    )(x, w)


# ---------------------------------------------------------------------------
# Kernel 2: tiled aggregation  out = act( A @ XW + b )
# ---------------------------------------------------------------------------
def _agg_kernel(a_ref, xw_ref, b_ref, o_ref, acc_ref, *, activation, f_valid):
    k = pl.program_id(1)

    @pl.when(k == 0)
    def _():
        acc_ref[...] = jnp.zeros_like(acc_ref)

    # bf16 x bf16 on the MXU, f32 accumulation.
    acc_ref[...] += jnp.dot(
        a_ref[...], xw_ref[...], preferred_element_type=jnp.float32
    )

    @pl.when(k == pl.num_programs(1) - 1)
    def _():
        h = acc_ref[...] + b_ref[...]
        if activation == "relu":
            h = jnp.maximum(h, 0.0)
        elif activation == "log_softmax":
            # Mask lane-padding columns so they do not pollute max / lse.
            col = jax.lax.broadcasted_iota(jnp.int32, h.shape, dimension=1)
            h = jnp.where(col < f_valid, h, _NEG_BIG)
            m = jnp.max(h, axis=-1, keepdims=True)
            s = h - m
            lse = jnp.log(jnp.sum(jnp.exp(s), axis=-1, keepdims=True))
            h = s - lse
        o_ref[...] = h.astype(o_ref.dtype)


def gcn_aggregate(a_bf16, xw_bf16, b, *, activation, f_valid, tm=256, tk=256):
    """act(A @ XW + b) with A tiled (tm, tk) over (output rows, reduction).

    Notes per generation (tiles kept conservative & correct everywhere):
      * v6e/v7x: tk can be raised to 512-1024 for better MXU fill.
      * v5e: tm=tk=128-256 is enough; consider pipeline_mode=pl.Buffered(3)
        on the A spec if the A stream is DMA-exposed.
    """
    n_pad = a_bf16.shape[0]
    f_pad = xw_bf16.shape[1]
    kernel = functools.partial(_agg_kernel, activation=activation, f_valid=f_valid)
    return pl.pallas_call(
        kernel,
        out_shape=jax.ShapeDtypeStruct((n_pad, f_pad), jnp.float32),
        grid=(n_pad // tm, n_pad // tk),
        in_specs=[
            pl.BlockSpec((tm, tk), lambda i, k: (i, k)),     # A tile
            pl.BlockSpec((tk, f_pad), lambda i, k: (k, 0)),  # XW tile
            pl.BlockSpec((1, f_pad), lambda i, k: (0, 0)),   # bias
        ],
        out_specs=pl.BlockSpec((tm, f_pad), lambda i, k: (i, 0)),
        scratch_shapes=[pltpu.VMEM((tm, f_pad), jnp.float32)],
        compiler_params=pltpu.CompilerParams(
            dimension_semantics=("parallel", "arbitrary"),
            vmem_limit_bytes=_VMEM_LIMIT,
        ),
    )(a_bf16, xw_bf16, b)


# ---------------------------------------------------------------------------
# Full forward
# ---------------------------------------------------------------------------
def _pad_params(weights, biases):
    pw, pb = [], []
    for w, b in zip(weights, biases):
        fi, fo = w.shape
        fi_p, fo_p = _round_up(fi, _LANE), _round_up(fo, _LANE)
        pw.append(jnp.zeros((fi_p, fo_p), jnp.float32).at[:fi, :fo].set(w))
        pb.append(jnp.zeros((1, fo_p), jnp.float32).at[:, :fo].set(b))
    return pw, pb


def adj_gcn_forward(x, adj, weights, biases, *, tile=256):
    """AdjGCN forward pass (eval mode) on TPU."""
    n, in_ch = x.shape
    out_ch = weights[-1].shape[1]
    num_layers = len(weights)

    n_pad = _round_up(n, tile)
    in_ch_pad = _round_up(in_ch, _LANE)

    pw, pb = _pad_params(weights, biases)

    # Pad node features / adjacency. A is 0/1 so the bf16 cast is exact; padded
    # rows/cols are zero so they contribute nothing to the reduction.
    x_p = jnp.zeros((n_pad, in_ch_pad), jnp.float32).at[:n, :in_ch].set(x)
    a_p = (
        jnp.zeros((n_pad, n_pad), jnp.bfloat16)
        .at[:n, :n]
        .set(adj.astype(jnp.bfloat16))
    )

    h = x_p
    for layer in range(num_layers):
        last = layer == num_layers - 1
        f_valid = weights[layer].shape[1]
        xw = feat_transform(h, pw[layer], tm=tile)
        h = gcn_aggregate(
            a_p,
            xw,
            pb[layer],
            activation="log_softmax" if last else "relu",
            f_valid=f_valid,
            tm=tile,
            tk=tile,
        )
        # dropout: identity in eval mode.
    return h[:n, :out_ch]


# ---------------------------------------------------------------------------
# Params / reference / test
# ---------------------------------------------------------------------------
def init_params(key, in_channels, hidden_channels, out_channels, num_layers):
    """Deterministic glorot-ish weight init, zero bias (matches GCNConv reset)."""
    layer_dims = [(in_channels, hidden_channels)]
    for _ in range(num_layers - 2):
        layer_dims.append((hidden_channels, hidden_channels))
    layer_dims.append((hidden_channels, out_channels))

    weights, biases = [], []
    for fi, fo in layer_dims:
        key, sub = jax.random.split(key)
        scale = jnp.sqrt(6.0 / (fi + fo))
        weights.append(jax.random.uniform(sub, (fi, fo), jnp.float32, -scale, scale))
        biases.append(jnp.zeros((1, fo), jnp.float32))
    return weights, biases


def ref_forward_bf16(x, adj, weights, biases):
    """Plain-XLA reference mirroring the kernel's bf16-input / f32-accumulate math."""
    a16 = adj.astype(jnp.bfloat16)
    h = x
    nl = len(weights)
    for layer in range(nl):
        xw = jnp.dot(
            h.astype(jnp.bfloat16),
            weights[layer].astype(jnp.bfloat16),
            preferred_element_type=jnp.float32,
        ).astype(jnp.bfloat16)
        z = jnp.dot(a16, xw, preferred_element_type=jnp.float32) + biases[layer]
        if layer < nl - 1:
            h = jnp.maximum(z, 0.0)
        else:
            h = jax.nn.log_softmax(z, axis=-1)
    return h


if __name__ == "__main__":
    # Small, forward-consistent shapes.
    N = 64          # number of graph nodes
    IN_CH = 16
    HIDDEN_CH = 32
    OUT_CH = 8
    NUM_LAYERS = 3
    DROPOUT = 0.5   # unused at inference

    key = jax.random.PRNGKey(0)
    key, kx, ka = jax.random.split(key, 3)

    # data.x : node features [N, IN_CH]
    x = jax.random.normal(kx, (N, IN_CH), jnp.float32)
    # data.adj_t : dense adjacency [N, N] (normalize=False -> used as-is)
    adj = (jax.random.uniform(ka, (N, N)) < 0.1).astype(jnp.float32)

    weights, biases = init_params(key, IN_CH, HIDDEN_CH, OUT_CH, NUM_LAYERS)

    out = adj_gcn_forward(x, adj, weights, biases)
    out = jax.block_until_ready(out)

    # Sanity: log_softmax rows should sum (in prob space) to ~1.
    row_sums = jnp.exp(out).sum(axis=-1)
    assert out.shape == (N, OUT_CH)
    assert bool(jnp.allclose(row_sums, 1.0, atol=1e-4))

    # Numerical check against an XLA reference with the same bf16/f32 math.
    # (Exact f32 PyTorch parity is intentionally traded for bf16 MXU throughput.)
    ref = ref_forward_bf16(x, adj, weights, biases)
    assert bool(jnp.allclose(out, ref, atol=1e-2, rtol=1e-2))

    print("KERNEL_OK")
</pallas_src>

<mosaic_0001>
module attributes {stable_mosaic.version = 11 : i64} {
  func.func @_feat_transform_kernel(%arg0: i32, %arg1: memref<256x128xf32, #tpu.memory_space<vmem>>, %arg2: memref<128x128xf32, #tpu.memory_space<vmem>>, %arg3: memref<256x128xbf16, #tpu.memory_space<vmem>>) attributes {dimension_semantics = [#tpu.dimension_semantics<parallel>], iteration_bounds = array<i64: 1>, scalar_prefetch = 0 : i64, scratch_operands = 0 : i64, tpu.core_type = #tpu.core_type<tc>, window_params = [{transform_indices = @transform_0, window_bounds = array<i64: 256, 128>}, {pipeline_mode = #tpu.pipeline_mode<synchronous>, transform_indices = @transform_1, window_bounds = array<i64: 128, 128>}, {transform_indices = @transform_2, window_bounds = array<i64: 256, 128>}]} {
    %c0 = arith.constant 0 : index
    %c0_0 = arith.constant 0 : index
    %0 = vector.load %arg1[%c0, %c0_0] : memref<256x128xf32, #tpu.memory_space<vmem>>, vector<256x128xf32>
    %1 = arith.truncf %0 : vector<256x128xf32> to vector<256x128xbf16>
    %c0_1 = arith.constant 0 : index
    %c0_2 = arith.constant 0 : index
    %2 = vector.load %arg2[%c0_1, %c0_2] : memref<128x128xf32, #tpu.memory_space<vmem>>, vector<128x128xf32>
    %3 = arith.truncf %2 : vector<128x128xf32> to vector<128x128xbf16>
    %cst = arith.constant dense<0.000000e+00> : vector<256x128xf32>
    %4 = tpu.matmul %1, %3, %cst {dimension_numbers = #tpu.dot_dimension_numbers<[1], [0], [0], [1], [0, 0, 1, 1], [], []>} : vector<256x128xbf16>, vector<128x128xbf16>, vector<256x128xf32> -> vector<256x128xf32>
    %5 = arith.truncf %4 : vector<256x128xf32> to vector<256x128xbf16>
    %c0_3 = arith.constant 0 : index
    %c0_4 = arith.constant 0 : index
    %6 = vector.load %arg3[%c0_3, %c0_4] : memref<256x128xbf16, #tpu.memory_space<vmem>>, vector<256x128xbf16>
    tpu.vector_store %arg3[%c0_3, %c0_4], %5 {strides = array<i32>} : memref<256x128xbf16, #tpu.memory_space<vmem>>, vector<256x128xbf16>,
    return
  }
  func.func @transform_0(%arg0: i32) -> (i32, i32) {
    %c0_i32 = arith.constant 0 : i32
    %c0_i32_0 = arith.constant 0 : i32
    return %arg0, %c0_i32 : i32, i32
  }
  func.func @transform_1(%arg0: i32) -> (i32, i32) {
    %c0_i32 = arith.constant 0 : i32
    %c0_i32_0 = arith.constant 0 : i32
    %c0_i32_1 = arith.constant 0 : i32
    return %c0_i32, %c0_i32_0 : i32, i32
  }
  func.func @transform_2(%arg0: i32) -> (i32, i32) {
    %c0_i32 = arith.constant 0 : i32
    %c0_i32_0 = arith.constant 0 : i32
    return %arg0, %c0_i32 : i32, i32
  }
}

</mosaic_0001>

<llo_original>
// kernel: tpu_custom_call.1
$region0: #{tpu_custom_call.1}
  #allocation0 [shape = 'u32[]', space=smem, size = 0x4, offset = 0x4, fixed_abs, tag = 'smem constant byte address 0x4 - core index']
  #allocation1 [shape = 'u32[72,128]{1,0:T(1,128)}', space=vmem, size = 0x9000, scoped, tag = 'internal scratch']
  %s0 = inlined_call_operand.hbm [shape: f32[256,128], index: 0, kind: input, shape index: {}]
  %s1 = inlined_call_operand.hbm [shape: f32[128,128], index: 1, kind: input, shape index: {}]
  %s2 = inlined_call_operand.hbm [shape: bf16[256,128], index: 2, kind: output, shape index: {}]
  %s3 = sld [smem:[#allocation0]]
  $region26: #{tpu_custom_call.1} parent=0
    _
  %s5 = ssub.s32 1, %s3
  %s6 = scalar_select 0, %s5, %s3
  $region1: #{tpu_custom_call.1} parent=0
    #allocation2 [shape = 'u8[131072]{0}', space=vmem, size = 0x20000, scoped, tag = 'input window, operand 0, single buffered']
    #allocation3 [shape = 's32[1]{0}', space=sflag, size = 0x4, scoped, tag = 'scoped memory for tpu_custom_call.1']
    #allocation4 [shape = 's32[1]{0}', space=sflag, size = 0x4, scoped, tag = 'scoped memory for tpu_custom_call.1']
    #allocation5 [shape = 'u8[65536]{0}', space=vmem, size = 0x10000, scoped, tag = 'input window, operand 1, single buffered']
    #allocation6 [shape = 's32[1]{0}', space=sflag, size = 0x4, scoped, tag = 'scoped memory for tpu_custom_call.1']
    #allocation7 [shape = 'u8[65536]{0}', space=vmem, size = 0x10000, scoped, tag = 'output window, operand 0, single buffered']
    %7 = vsyncpa [#allocation3], 0
    %8 = vsyncpa [#allocation6], 0
    %9 = vsyncpa [#allocation4], 0
    // Predicated region
    $region2: #{tpu_custom_call.1} parent=1 // pred_check
      _
    $region3: #{tpu_custom_call.1} parent=1 // pred_check_branch
      %11 = sbr.rel (0) target = $region5
    $region4: #{tpu_custom_call.1} parent=1 // pred_region
      %13 = vsyncadd [#allocation3], 0
      %s14 = sshll.u32 %s0, 4
      %s15 = int_to_ptr.hbm [resolvable:$true] %s14
      %s16 = sshll.u32 [#allocation2], 4
      %s17 = int_to_ptr.vmem [resolvable:$true] %s16
      %22 = dma.hbm_to_vmem [thread:$0]  %s15, 4096, %s17, [#allocation3], 128, 128, 8
    $region5: #{tpu_custom_call.1} parent=1 // pred_fallthru
      _
    // Predicated region
    $region6: #{tpu_custom_call.1} parent=1 // pred_check
      _
    $region7: #{tpu_custom_call.1} parent=1 // pred_check_branch
      %24 = sbr.rel (0) target = $region9
    $region8: #{tpu_custom_call.1} parent=1 // pred_region
      %26 = vsyncadd [#allocation6], 0
      %s27 = sshll.u32 %s1, 4
      %s28 = int_to_ptr.hbm [resolvable:$true] %s27
      %s29 = sshll.u32 [#allocation5], 4
      %s30 = int_to_ptr.vmem [resolvable:$true] %s29
      %35 = dma.hbm_to_vmem [thread:$0]  %s28, 2048, %s30, [#allocation6], 128, 128, 8
    $region9: #{tpu_custom_call.1} parent=1 // pred_fallthru
      _
    // Predicated region
    $region10: #{tpu_custom_call.1} parent=1 // pred_check
      _
    $region11: #{tpu_custom_call.1} parent=1 // pred_check_branch
      %37 = sbr.rel (0) target = $region13
    $region12: #{tpu_custom_call.1} parent=1 // pred_region
      %39 = dma.done [#allocation3], 4096
    $region13: #{tpu_custom_call.1} parent=1 // pred_fallthru
      _
    // Predicated region
    $region14: #{tpu_custom_call.1} parent=1 // pred_check
      _
    $region15: #{tpu_custom_call.1} parent=1 // pred_check_branch
      %41 = sbr.rel (0) target = $region17
    $region16: #{tpu_custom_call.1} parent=1 // pred_region
      %43 = dma.done [#allocation6], 2048
    $region17: #{tpu_custom_call.1} parent=1 // pred_fallthru
      _
    %v44 = vld [vmem:[#allocation2] sm:$0xff]
    %v45 = vld [vmem:[#allocation2 + $0x8] sm:$0xff]
    %v46 = vld [vmem:[#allocation2 + $0x10] sm:$0xff]
    %v47 = vld [vmem:[#allocation2 + $0x18] sm:$0xff]
    %v48 = vld [vmem:[#allocation2 + $0x20] sm:$0xff]
    %v49 = vld [vmem:[#allocation2 + $0x28] sm:$0xff]
    %v50 = vld [vmem:[#allocation2 + $0x30] sm:$0xff]
    %v51 = vld [vmem:[#allocation2 + $0x38] sm:$0xff]
    %v52 = vld [vmem:[#allocation2 + $0x40] sm:$0xff]
    %v53 = vld [vmem:[#allocation2 + $0x48] sm:$0xff]
    %v54 = vld [vmem:[#allocation2 + $0x50] sm:$0xff]
    %v55 = vld [vmem:[#allocation2 + $0x58] sm:$0xff]
    %v56 = vld [vmem:[#allocation2 + $0x60] sm:$0xff]
    %v57 = vld [vmem:[#allocation2 + $0x68] sm:$0xff]
    %v58 = vld [vmem:[#allocation2 + $0x70] sm:$0xff]
    %v59 = vld [vmem:[#allocation2 + $0x78] sm:$0xff]
    %v60 = vld [vmem:[#allocation2 + $0x80] sm:$0xff]
    %v61 = vld [vmem:[#allocation2 + $0x88] sm:$0xff]
    %v62 = vld [vmem:[#allocation2 + $0x90] sm:$0xff]
    %v63 = vld [vmem:[#allocation2 + $0x98] sm:$0xff]
    %v64 = vld [vmem:[#allocation2 + $0xa0] sm:$0xff]
    %v65 = vld [vmem:[#allocation2 + $0xa8] sm:$0xff]
    %v66 = vld [vmem:[#allocation2 + $0xb0] sm:$0xff]
    %v67 = vld [vmem:[#allocation2 + $0xb8] sm:$0xff]
    %v68 = vld [vmem:[#allocation2 + $0xc0] sm:$0xff]
    %v69 = vld [vmem:[#allocation2 + $0xc8] sm:$0xff]
    %v70 = vld [vmem:[#allocation2 + $0xd0] sm:$0xff]
    %v71 = vld [vmem:[#allocation2 + $0xd8] sm:$0xff]
    %v72 = vld [vmem:[#allocation2 + $0xe0] sm:$0xff]
    %v73 = vld [vmem:[#allocation2 + $0xe8] sm:$0xff]
    %v74 = vld [vmem:[#allocation2 + $0xf0] sm:$0xff]
    %v75 = vld [vmem:[#allocation2 + $0xf8] sm:$0xff]
    %v76 = vpack.c.bf16 %v45, %v44
    %v77 = vpack.c.bf16 %v47, %v46
    %v78 = vpack.c.bf16 %v49, %v48
    %v79 = vpack.c.bf16 %v51, %v50
    %v80 = vpack.c.bf16 %v53, %v52
    %v81 = vpack.c.bf16 %v55, %v54
    %v82 = vpack.c.bf16 %v57, %v56
    %v83 = vpack.c.bf16 %v59, %v58
    %v84 = vpack.c.bf16 %v61, %v60
    %v85 = vpack.c.bf16 %v63, %v62
    %v86 = vpack.c.bf16 %v65, %v64
    %v87 = vpack.c.bf16 %v67, %v66
    %v88 = vpack.c.bf16 %v69, %v68
    %v89 = vpack.c.bf16 %v71, %v70
    %v90 = vpack.c.bf16 %v73, %v72
    %v91 = vpack.c.bf16 %v75, %v74
    %v92 = vld [vmem:[#allocation5] sm:$0xff]
    %v93 = vld [vmem:[#allocation5 + $0x8] sm:$0xff]
    %v94 = vld [vmem:[#allocation5 + $0x10] sm:$0xff]
    %v95 = vld [vmem:[#allocation5 + $0x18] sm:$0xff]
    %v96 = vld [vmem:[#allocation5 + $0x20] sm:$0xff]
    %v97 = vld [vmem:[#allocation5 + $0x28] sm:$0xff]
    %v98 = vld [vmem:[#allocation5 + $0x30] sm:$0xff]
    %v99 = vld [vmem:[#allocation5 + $0x38] sm:$0xff]
    %v100 = vld [vmem:[#allocation5 + $0x40] sm:$0xff]
    %v101 = vld [vmem:[#allocation5 + $0x48] sm:$0xff]
    %v102 = vld [vmem:[#allocation5 + $0x50] sm:$0xff]
    %v103 = vld [vmem:[#allocation5 + $0x58] sm:$0xff]
    %v104 = vld [vmem:[#allocation5 + $0x60] sm:$0xff]
    %v105 = vld [vmem:[#allocation5 + $0x68] sm:$0xff]
    %v106 = vld [vmem:[#allocation5 + $0x70] sm:$0xff]
    %v107 = vld [vmem:[#allocation5 + $0x78] sm:$0xff]
    %v108 = vpack.c.bf16 %v93, %v92
    %v109 = vpack.c.bf16 %v95, %v94
    %v110 = vpack.c.bf16 %v97, %v96
    %v111 = vpack.c.bf16 %v99, %v98
    %v112 = vpack.c.bf16 %v101, %v100
    %v113 = vpack.c.bf16 %v103, %v102
    %v114 = vpack.c.bf16 %v105, %v104
    %v115 = vpack.c.bf16 %v107, %v106
    %116 = vmatpush.bf16.msra.mxu0 %v115
    %117 = vmatpush.bf16.msra.mxu0 %v114
    %118 = vmatpush.bf16.msra.mxu0 %v113
    %119 = vmatpush.bf16.msra.mxu0 %v112
    %120 = vmatpush.bf16.msra.mxu0 %v111
    %121 = vmatpush.bf16.msra.mxu0 %v110
    %122 = vmatpush.bf16.msra.mxu0 %v109
    %123 = vmatpush.bf16.msra.mxu0 %v108
    %124 = vmatmul.bf16.gmra.mxu0 %v76
    %v125 = vpop.f32.mrf.mxu0
    %v126 = vadd.f32 0.0, %v125
    %v127 = vpop.f32.mrf.mxu0
    %v128 = vadd.f32 0.0, %v127
    %129 = vmatmul.bf16.gmra.mxu0 %v77
    %v130 = vpop.f32.mrf.mxu0
    %v131 = vadd.f32 0.0, %v130
    %v132 = vpop.f32.mrf.mxu0
    %v133 = vadd.f32 0.0, %v132
    %134 = vmatmul.bf16.gmra.mxu0 %v78
    %v135 = vpop.f32.mrf.mxu0
    %v136 = vadd.f32 0.0, %v135
    %v137 = vpop.f32.mrf.mxu0
    %v138 = vadd.f32 0.0, %v137
    %139 = vmatmul.bf16.gmra.mxu0 %v79
    %v140 = vpop.f32.mrf.mxu0
    %v141 = vadd.f32 0.0, %v140
    %v142 = vpop.f32.mrf.mxu0
    %v143 = vadd.f32 0.0, %v142
    %144 = vmatmul.bf16.gmra.mxu0 %v80
    %v145 = vpop.f32.mrf.mxu0
    %v146 = vadd.f32 0.0, %v145
    %v147 = vpop.f32.mrf.mxu0
    %v148 = vadd.f32 0.0, %v147
    %149 = vmatmul.bf16.gmra.mxu0 %v81
    %v150 = vpop.f32.mrf.mxu0
    %v151 = vadd.f32 0.0, %v150
    %v152 = vpop.f32.mrf.mxu0
    %v153 = vadd.f32 0.0, %v152
    %154 = vmatmul.bf16.gmra.mxu0 %v82
    %v155 = vpop.f32.mrf.mxu0
    %v156 = vadd.f32 0.0, %v155
    %v157 = vpop.f32.mrf.mxu0
    %v158 = vadd.f32 0.0, %v157
    %159 = vmatmul.bf16.gmra.mxu0 %v83
    %v160 = vpop.f32.mrf.mxu0
    %v161 = vadd.f32 0.0, %v160
    %v162 = vpop.f32.mrf.mxu0
    %v163 = vadd.f32 0.0, %v162
    %164 = vmatmul.bf16.gmra.mxu0 %v84
    %v165 = vpop.f32.mrf.mxu0
    %v166 = vadd.f32 0.0, %v165
    %v167 = vpop.f32.mrf.mxu0
    %v168 = vadd.f32 0.0, %v167
    %169 = vmatmul.bf16.gmra.mxu0 %v85
    %v170 = vpop.f32.mrf.mxu0
    %v171 = vadd.f32 0.0, %v170
    %v172 = vpop.f32.mrf.mxu0
    %v173 = vadd.f32 0.0, %v172
    %174 = vmatmul.bf16.gmra.mxu0 %v86
    %v175 = vpop.f32.mrf.mxu0
    %v176 = vadd.f32 0.0, %v175
    %v177 = vpop.f32.mrf.mxu0
    %v178 = vadd.f32 0.0, %v177
    %179 = vmatmul.bf16.gmra.mxu0 %v87
    %v180 = vpop.f32.mrf.mxu0
    %v181 = vadd.f32 0.0, %v180
    %v182 = vpop.f32.mrf.mxu0
    %v183 = vadd.f32 0.0, %v182
    %184 = vmatmul.bf16.gmra.mxu0 %v88
    %v185 = vpop.f32.mrf.mxu0
    %v186 = vadd.f32 0.0, %v185
    %v187 = vpop.f32.mrf.mxu0
    %v188 = vadd.f32 0.0, %v187
    %189 = vmatmul.bf16.gmra.mxu0 %v89
    %v190 = vpop.f32.mrf.mxu0
    %v191 = vadd.f32 0.0, %v190
    %v192 = vpop.f32.mrf.mxu0
    %v193 = vadd.f32 0.0, %v192
    %194 = vmatmul.bf16.gmra.mxu0 %v90
    %v195 = vpop.f32.mrf.mxu0
    %v196 = vadd.f32 0.0, %v195
    %v197 = vpop.f32.mrf.mxu0
    %v198 = vadd.f32 0.0, %v197
    %199 = vmatmul.bf16.gmra.mxu0 %v91
    %v200 = vpop.f32.mrf.mxu0
    %v201 = vadd.f32 0.0, %v200
    %v202 = vpop.f32.mrf.mxu0
    %v203 = vadd.f32 0.0, %v202
    %204 = vdwg.mxu0
    %v205 = vpack.c.bf16 %v126, %v126
    %v206 = vpack.c.bf16 %v128, %v128
    %v207 = vpack.c.bf16 %v131, %v131
    %v208 = vpack.c.bf16 %v133, %v133
    %v209 = vpack.c.bf16 %v136, %v136
    %v210 = vpack.c.bf16 %v138, %v138
    %v211 = vpack.c.bf16 %v141, %v141
    %v212 = vpack.c.bf16 %v143, %v143
    %v213 = vpack.c.bf16 %v146, %v146
    %v214 = vpack.c.bf16 %v148, %v148
    %v215 = vpack.c.bf16 %v151, %v151
    %v216 = vpack.c.bf16 %v153, %v153
    %v217 = vpack.c.bf16 %v156, %v156
    %v218 = vpack.c.bf16 %v158, %v158
    %v219 = vpack.c.bf16 %v161, %v161
    %v220 = vpack.c.bf16 %v163, %v163
    %v221 = vpack.c.bf16 %v166, %v166
    %v222 = vpack.c.bf16 %v168, %v168
    %v223 = vpack.c.bf16 %v171, %v171
    %v224 = vpack.c.bf16 %v173, %v173
    %v225 = vpack.c.bf16 %v176, %v176
    %v226 = vpack.c.bf16 %v178, %v178
    %v227 = vpack.c.bf16 %v181, %v181
    %v228 = vpack.c.bf16 %v183, %v183
    %v229 = vpack.c.bf16 %v186, %v186
    %v230 = vpack.c.bf16 %v188, %v188
    %v231 = vpack.c.bf16 %v191, %v191
    %v232 = vpack.c.bf16 %v193, %v193
    %v233 = vpack.c.bf16 %v196, %v196
    %v234 = vpack.c.bf16 %v198, %v198
    %v235 = vpack.c.bf16 %v201, %v201
    %v236 = vpack.c.bf16 %v203, %v203
    %237 = vst [vmem:[#allocation7] sm:$0xf] %v205
    %238 = vst [vmem:[#allocation7 + $0x4] sm:$0xf] %v206
    %239 = vst [vmem:[#allocation7 + $0x8] sm:$0xf] %v207
    %240 = vst [vmem:[#allocation7 + $0xc] sm:$0xf] %v208
    %241 = vst [vmem:[#allocation7 + $0x10] sm:$0xf] %v209
    %242 = vst [vmem:[#allocation7 + $0x14] sm:$0xf] %v210
    %243 = vst [vmem:[#allocation7 + $0x18] sm:$0xf] %v211
    %244 = vst [vmem:[#allocation7 + $0x1c] sm:$0xf] %v212
    %245 = vst [vmem:[#allocation7 + $0x20] sm:$0xf] %v213
    %246 = vst [vmem:[#allocation7 + $0x24] sm:$0xf] %v214
    %247 = vst [vmem:[#allocation7 + $0x28] sm:$0xf] %v215
    %248 = vst [vmem:[#allocation7 + $0x2c] sm:$0xf] %v216
    %249 = vst [vmem:[#allocation7 + $0x30] sm:$0xf] %v217
    %250 = vst [vmem:[#allocation7 + $0x34] sm:$0xf] %v218
    %251 = vst [vmem:[#allocation7 + $0x38] sm:$0xf] %v219
    %252 = vst [vmem:[#allocation7 + $0x3c] sm:$0xf] %v220
    %253 = vst [vmem:[#allocation7 + $0x40] sm:$0xf] %v221
    %254 = vst [vmem:[#allocation7 + $0x44] sm:$0xf] %v222
    %255 = vst [vmem:[#allocation7 + $0x48] sm:$0xf] %v223
    %256 = vst [vmem:[#allocation7 + $0x4c] sm:$0xf] %v224
    %257 = vst [vmem:[#allocation7 + $0x50] sm:$0xf] %v225
    %258 = vst [vmem:[#allocation7 + $0x54] sm:$0xf] %v226
    %259 = vst [vmem:[#allocation7 + $0x58] sm:$0xf] %v227
    %260 = vst [vmem:[#allocation7 + $0x5c] sm:$0xf] %v228
    %261 = vst [vmem:[#allocation7 + $0x60] sm:$0xf] %v229
    %262 = vst [vmem:[#allocation7 + $0x64] sm:$0xf] %v230
    %263 = vst [vmem:[#allocation7 + $0x68] sm:$0xf] %v231
    %264 = vst [vmem:[#allocation7 + $0x6c] sm:$0xf] %v232
    %265 = vst [vmem:[#allocation7 + $0x70] sm:$0xf] %v233
    %266 = vst [vmem:[#allocation7 + $0x74] sm:$0xf] %v234
    %267 = vst [vmem:[#allocation7 + $0x78] sm:$0xf] %v235
    %268 = vst [vmem:[#allocation7 + $0x7c] sm:$0xf] %v236
    // Predicated region
    $region18: #{tpu_custom_call.1} parent=1 // pred_check
      _
    $region19: #{tpu_custom_call.1} parent=1 // pred_check_branch
      %270 = sbr.rel (0) target = $region21
    $region20: #{tpu_custom_call.1} parent=1 // pred_region
      %272 = vsyncadd [#allocation4], 0
      %s273 = sshll.u32 [#allocation7], 4
      %s274 = int_to_ptr.vmem [resolvable:$true] %s273
      %s275 = sshll.u32 %s2, 4
      %s276 = int_to_ptr.hbm [resolvable:$true] %s275
      %281 = dma.vmem_to_hbm [thread:$0]  %s274, 2048, %s276, [#allocation4], 64, 64, 4
    $region21: #{tpu_custom_call.1} parent=1 // pred_fallthru
      _
    // Predicated region
    $region22: #{tpu_custom_call.1} parent=1 // pred_check
      _
    $region23: #{tpu_custom_call.1} parent=1 // pred_check_branch
      %283 = sbr.rel (0) target = $region25
    $region24: #{tpu_custom_call.1} parent=1 // pred_region
      %285 = dma.done [#allocation4], 2048
    $region25: #{tpu_custom_call.1} parent=1 // pred_fallthru
      _
    %286 = vsyncpa [#allocation3], 1
    %287 = vsyncpa [#allocation6], 1
    %288 = vsyncpa [#allocation4], 1

</llo_original>
